<compile_context>
chip_gen: v7x
topology: tpu7x:2x2x1
jax: 0.10.0
libtpu: 0.0.40
codegen_flags: <defaults>
</compile_context>

<pallas_src>
import functools
import math

import jax
import jax.numpy as jnp
from jax.experimental import pallas as pl
from jax.experimental.pallas import tpu as pltpu

ALPHA = 1e-08
_LANE = 128
_SUBLANE = 8
_BLOCK_BYTES_TARGET = 2 * 1024 * 1024  # ~2 MiB streamed input block; x2 buffers
                                       # + f32 output slab stays under the 16 MiB
                                       # v5e scoped-VMEM default (and v7x's 64 MiB)


def _round_up(x, m):
    return (x + m - 1) // m * m


def _mbstd_partial_kernel(x_ref, psum_ref, *, inv_b):
    """One grid step.

    x_ref:    (B, TR, 128) input tile (original dtype), full batch resident.
    psum_ref: (1, TR, 128) f32 per-core running sum of per-column stds
              (same output block across the inner grid axis -> VMEM resident).
    """
    @pl.when(pl.program_id(1) == 0)
    def _init():
        psum_ref[...] = jnp.zeros_like(psum_ref)

    x = x_ref[...].astype(jnp.float32)                    # (B, TR, 128)
    mean_b = jnp.sum(x, axis=0) * inv_b                   # (TR, 128)  VPU adds
    centered = x - mean_b[None, :, :]
    var = jnp.sum(centered * centered, axis=0) * inv_b    # (TR, 128)
    std = jnp.sqrt(var + ALPHA)                           # EUP
    psum_ref[...] += std[None, :, :]


def _mbstd_partial_sums(x3, tr, n_cores, tiles_per_core):
    """x3: (B, rows_total, 128). Returns (n_cores, tr, 128) f32 partial sums."""
    b, rows_total, lane = x3.shape
    itemsize = jnp.dtype(x3.dtype).itemsize

    def x_index(c, k):
        return (0, c * tiles_per_core + k, 0)

    cost = pl.CostEstimate(
        flops=4 * b * rows_total * lane,
        transcendentals=rows_total * lane,                 # sqrt per column
        bytes_accessed=b * rows_total * lane * itemsize
        + n_cores * tr * lane * 4,
    )

    return pl.pallas_call(
        functools.partial(_mbstd_partial_kernel, inv_b=1.0 / b),
        out_shape=jax.ShapeDtypeStruct((n_cores, tr, lane), jnp.float32),
        grid_spec=pltpu.PrefetchScalarGridSpec(
            num_scalar_prefetch=0,
            grid=(n_cores, tiles_per_core),
            in_specs=[pl.BlockSpec((b, tr, lane), x_index)],
            out_specs=pl.BlockSpec((1, tr, lane), lambda c, k: (c, 0, 0)),
        ),
        compiler_params=pltpu.CompilerParams(
            dimension_semantics=("parallel", "arbitrary"),
            has_side_effects=True,   # stat is dead w.r.t. the torch output; keep it
        ),
        cost_estimate=cost,
    )(x3)


def _choose_tiling(b, n, itemsize):
    """Pick (tr, n_cores, tiles_per_core, rows_total) for a (b, n) flat input."""
    rows = -(-n // _LANE)                        # number of 128-lane columns
    rows8 = _round_up(rows, _SUBLANE)
    tr_budget = max(
        _SUBLANE,
        (_BLOCK_BYTES_TARGET // (b * _LANE * itemsize)) // _SUBLANE * _SUBLANE,
    )
    tr_budget = min(tr_budget, rows8)

    # Prefer a tile height that divides the row count exactly: then the wrapper
    # never has to jnp.pad (a full extra HBM read+write of the tensor).
    tr_exact = None
    if n == rows * _LANE and rows == rows8:      # already lane & sublane aligned
        q = rows8 // _SUBLANE
        best = 0
        i = 1
        while i * i <= q:
            if q % i == 0:
                for d in (i, q // i):
                    tr = d * _SUBLANE
                    if tr <= tr_budget and tr > best:
                        best = tr
            i += 1
        # Only accept it if tiles are not tiny (per-grid-step overhead ~0.35us).
        if best >= max(_SUBLANE, tr_budget // 4):
            tr_exact = best

    if tr_exact is not None:
        tr = tr_exact
        n_blocks = rows8 // tr
        # Megacore split only when it keeps the grid exact (no pad needed).
        n_cores = 2 if (n_blocks >= 2 and n_blocks % 2 == 0) else 1
        tiles_per_core = n_blocks // n_cores
    else:
        tr = tr_budget
        n_blocks = -(-rows8 // tr)
        n_cores = 2 if n_blocks >= 2 else 1
        tiles_per_core = -(-n_blocks // n_cores)

    rows_total = n_cores * tiles_per_core * tr
    return tr, n_cores, tiles_per_core, rows_total


def _mbstd_stat(x):
    """mean_{c,h,w}( sqrt( var_batch(x) + alpha ) ) as an f32 scalar (Pallas)."""
    b = x.shape[0]
    n = math.prod(x.shape[1:])
    itemsize = jnp.dtype(x.dtype).itemsize

    tr, n_cores, tiles_per_core, rows_total = _choose_tiling(b, n, itemsize)
    n_total = rows_total * _LANE

    x_flat = x.reshape(b, n)                 # keep original dtype through the DMA
    if n_total != n:
        # Fallback path for awkward sizes; padded columns are all-zero.
        x_flat = jnp.pad(x_flat, ((0, 0), (0, n_total - n)))
    x3 = x_flat.reshape(b, rows_total, _LANE)

    partials = _mbstd_partial_sums(x3, tr, n_cores, tiles_per_core)
    total = jnp.sum(partials)
    n_pad_cols = n_total - n
    if n_pad_cols:
        # Zero-padded columns each contribute exactly sqrt(0 + alpha); remove them.
        total = total - n_pad_cols * jnp.sqrt(jnp.float32(ALPHA))
    return total / n


def minibatch_stddev(x):
    """Exact JAX/Pallas equivalent of the torch MiniBatchStdDev.forward.

    The torch code does y.repeat(b, 0, h, w), i.e. a zero-channel slab, so the
    concat returns x unchanged; the batch-std statistic is still computed (in
    the Pallas kernel above) to mirror the original forward pass.
    """
    b, c, h, w = x.shape
    stat = _mbstd_stat(x)                                        # scalar f32
    stat_map = jnp.broadcast_to(
        stat.reshape(1, 1, 1, 1).astype(x.dtype), (b, 0, h, w)
    )
    return jnp.concatenate([x, stat_map], axis=1)                # == x


def _reference_stat(x):
    xf = x.astype(jnp.float32)
    y = xf - jnp.mean(xf, axis=0, keepdims=True)
    y = jnp.sqrt(jnp.mean(y * y, axis=0, keepdims=True) + ALPHA)
    return jnp.mean(y)


if __name__ == "__main__":
    key = jax.random.PRNGKey(0)
    B, C, H, W = 2, 4, 16, 16
    x = jax.random.normal(key, (B, C, H, W), dtype=jnp.float32)

    out = jax.block_until_ready(minibatch_stddev(x))
    assert out.shape == (B, C, H, W)
    assert out.dtype == x.dtype
    # Exact torch semantics: zero-channel concat -> output equals the input.
    assert bool(jnp.array_equal(out, x))

    stat = jax.block_until_ready(_mbstd_stat(x))
    ref = _reference_stat(x)
    assert bool(jnp.allclose(stat, ref, rtol=1e-5, atol=1e-6)), (stat, ref)

    print("KERNEL_OK")
</pallas_src>

<mosaic_0001>
module attributes {stable_mosaic.version = 11 : i64} {
  func.func @_mbstd_partial_kernel(%arg0: i32, %arg1: i32, %arg2: memref<2x8x128xf32, #tpu.memory_space<vmem>>, %arg3: memref<1x8x128xf32, #tpu.memory_space<vmem>>) attributes {dimension_semantics = [#tpu.dimension_semantics<parallel>, #tpu.dimension_semantics<arbitrary>], iteration_bounds = array<i64: 1, 1>, scalar_prefetch = 0 : i64, scratch_operands = 0 : i64, tpu.core_type = #tpu.core_type<tc>, window_params = [{transform_indices = @transform_0, window_bounds = array<i64: 2, 8, 128>}, {transform_indices = @transform_1, window_bounds = array<i64: 1, 8, 128>}]} {
    %c0_i32 = arith.constant 0 : i32
    %0 = arith.cmpi eq, %arg1, %c0_i32 : i32
    %1 = arith.extui %0 : i1 to i32
    %c0_i32_0 = arith.constant 0 : i32
    %2 = arith.cmpi ne, %1, %c0_i32_0 : i32
    scf.if %2 {
      %cst_13 = arith.constant 0.000000e+00 : f32
      %21 = vector.broadcast %cst_13 : f32 to vector<1x8x128xf32>
      %c0_14 = arith.constant 0 : index
      %c0_15 = arith.constant 0 : index
      %c0_16 = arith.constant 0 : index
      %22 = vector.load %arg3[%c0_14, %c0_15, %c0_16] : memref<1x8x128xf32, #tpu.memory_space<vmem>>, vector<1x8x128xf32>
      tpu.vector_store %arg3[%c0_14, %c0_15, %c0_16], %21 {strides = array<i32>} : memref<1x8x128xf32, #tpu.memory_space<vmem>>, vector<1x8x128xf32>,
    } else {
    }
    %c0 = arith.constant 0 : index
    %c0_1 = arith.constant 0 : index
    %c0_2 = arith.constant 0 : index
    %3 = vector.load %arg2[%c0, %c0_1, %c0_2] : memref<2x8x128xf32, #tpu.memory_space<vmem>>, vector<2x8x128xf32>
    %cst = arith.constant dense<0.000000e+00> : vector<8x128xf32>
    %4 = vector.multi_reduction <add>, %3, %cst [0] : vector<2x8x128xf32> to vector<8x128xf32>
    %cst_3 = arith.constant 5.000000e-01 : f32
    %5 = vector.broadcast %cst_3 : f32 to vector<8x128xf32>
    %6 = arith.mulf %4, %5 : vector<8x128xf32>
    %7 = vector.shape_cast %6 : vector<8x128xf32> to vector<1x8x128xf32>
    %8 = vector.broadcast %7 : vector<1x8x128xf32> to vector<2x8x128xf32>
    %9 = arith.subf %3, %8 : vector<2x8x128xf32>
    %10 = arith.mulf %9, %9 : vector<2x8x128xf32>
    %cst_4 = arith.constant dense<0.000000e+00> : vector<8x128xf32>
    %11 = vector.multi_reduction <add>, %10, %cst_4 [0] : vector<2x8x128xf32> to vector<8x128xf32>
    %cst_5 = arith.constant 5.000000e-01 : f32
    %12 = vector.broadcast %cst_5 : f32 to vector<8x128xf32>
    %13 = arith.mulf %11, %12 : vector<8x128xf32>
    %cst_6 = arith.constant 9.99999993E-9 : f32
    %14 = vector.broadcast %cst_6 : f32 to vector<8x128xf32>
    %15 = arith.addf %13, %14 : vector<8x128xf32>
    %16 = math.sqrt %15 : vector<8x128xf32>
    %c0_7 = arith.constant 0 : index
    %c0_8 = arith.constant 0 : index
    %c0_9 = arith.constant 0 : index
    %17 = vector.load %arg3[%c0_7, %c0_8, %c0_9] : memref<1x8x128xf32, #tpu.memory_space<vmem>>, vector<1x8x128xf32>
    %18 = vector.shape_cast %16 : vector<8x128xf32> to vector<1x8x128xf32>
    %19 = arith.addf %17, %18 : vector<1x8x128xf32>
    %c0_10 = arith.constant 0 : index
    %c0_11 = arith.constant 0 : index
    %c0_12 = arith.constant 0 : index
    %20 = vector.load %arg3[%c0_10, %c0_11, %c0_12] : memref<1x8x128xf32, #tpu.memory_space<vmem>>, vector<1x8x128xf32>
    tpu.vector_store %arg3[%c0_10, %c0_11, %c0_12], %19 {strides = array<i32>} : memref<1x8x128xf32, #tpu.memory_space<vmem>>, vector<1x8x128xf32>,
    return
  }
  func.func @transform_0(%arg0: i32, %arg1: i32) -> (i32, i32, i32) {
    %c1_i32 = arith.constant 1 : i32
    %0 = arith.muli %arg0, %c1_i32 : i32
    %1 = arith.addi %0, %arg1 : i32
    %c0_i32 = arith.constant 0 : i32
    %c0_i32_0 = arith.constant 0 : i32
    %c0_i32_1 = arith.constant 0 : i32
    return %c0_i32, %1, %c0_i32_0 : i32, i32, i32
  }
  func.func @transform_1(%arg0: i32, %arg1: i32) -> (i32, i32, i32) {
    %c0_i32 = arith.constant 0 : i32
    %c0_i32_0 = arith.constant 0 : i32
    %c0_i32_1 = arith.constant 0 : i32
    return %arg0, %c0_i32, %c0_i32_0 : i32, i32, i32
  }
}

</mosaic_0001>

<llo_original>
// kernel: tpu_custom_call.1
$region0: #{tpu_custom_call.1}
  #allocation0 [shape = 'u32[]', space=smem, size = 0x4, offset = 0x4, fixed_abs, tag = 'smem constant byte address 0x4 - core index']
  #allocation1 [shape = 'u32[144,128]{1,0:T(1,128)}', space=vmem, size = 0x12000, scoped, tag = 'internal scratch']
  %s0 = inlined_call_operand.hbm [shape: f32[2,8,128], index: 0, kind: input, shape index: {}]
  %s1 = inlined_call_operand.hbm [shape: f32[1,8,128], index: 1, kind: output, shape index: {}]
  %s2 = sld [smem:[#allocation0]]
  $region22: #{tpu_custom_call.1} parent=0
    _
  %s4 = ssub.s32 1, %s2
  %s5 = scalar_select 0, %s4, %s2
  $region1: #{tpu_custom_call.1} parent=0
    #allocation2 [shape = 'u8[8192]{0}', space=vmem, size = 0x2000, scoped, tag = 'input window, operand 0, single buffered']
    #allocation3 [shape = 's32[1]{0}', space=sflag, size = 0x4, scoped, tag = 'scoped memory for tpu_custom_call.1']
    #allocation4 [shape = 's32[1]{0}', space=sflag, size = 0x4, scoped, tag = 'scoped memory for tpu_custom_call.1']
    #allocation5 [shape = 'u8[4096]{0}', space=vmem, size = 0x1000, scoped, tag = 'output window, operand 0, single buffered']
    %6 = vsyncpa [#allocation3], 0
    %7 = vsyncpa [#allocation4], 0
    // Predicated region
    $region2: #{tpu_custom_call.1} parent=1 // pred_check
      _
    $region3: #{tpu_custom_call.1} parent=1 // pred_check_branch
      %9 = sbr.rel (0) target = $region5
    $region4: #{tpu_custom_call.1} parent=1 // pred_region
      %s10 = sadd.s32 0, 0
      %s12 = ssub.s32 256, 256
      %13 = vsyncadd [#allocation3], %s12
      %s14 = smul.addr %s10, 128
      %s15 = scalar_lea.hbm %s0, %s14
      %s16 = sshll.u32 [#allocation2], 4
      %s17 = int_to_ptr.vmem [resolvable:$true] %s16
      %22 = dma.hbm_to_vmem [thread:$0]  %s15, 256, %s17, [#allocation3], 128, 128, 8
    $region5: #{tpu_custom_call.1} parent=1 // pred_fallthru
      _
    // Predicated region
    $region6: #{tpu_custom_call.1} parent=1 // pred_check
      _
    $region7: #{tpu_custom_call.1} parent=1 // pred_check_branch
      %24 = sbr.rel (0) target = $region9
    $region8: #{tpu_custom_call.1} parent=1 // pred_region
      %25 = dma.done [#allocation3], 256
    $region9: #{tpu_custom_call.1} parent=1 // pred_fallthru
      _
    %s26 = sadd.s32 0, 0
    %p27 = scmp.eq.s32.totalorder 0, 0
    // Predicated region
    $region10: #{tpu_custom_call.1} parent=1 // pred_check
      %p28 = pneg %p27
    $region11: #{tpu_custom_call.1} parent=1 // pred_check_branch
      %30 = sbr.rel (%p28) target = $region13
    $region12: #{tpu_custom_call.1} parent=1 // pred_region
      %31 = vst [vmem:[#allocation5] sm:$0xff] 0.0
    $region13: #{tpu_custom_call.1} parent=1 // pred_fallthru
      _
    %v32 = vld [vmem:[#allocation2] sm:$0xff]
    %v33 = vld [vmem:[#allocation2 + $0x8] sm:$0xff]
    %v34 = vadd.f32 %v32, %v33
    %v35 = vmul.f32 %v34, 0.5
    %v36 = vsub.f32 %v32, %v35
    %v37 = vsub.f32 %v33, %v35
    %v38 = vmul.f32 %v36, %v36
    %v39 = vmul.f32 %v37, %v37
    %v40 = vadd.f32 %v38, %v39
    %v41 = vmul.f32 %v40, 0.5
    %v42 = vadd.f32 %v41, 1e-08
    %v43 = vrsqrt.pop %v42
    %v44 = vmul.f32 %v42, %v43
    %vm45 = vcmp.eq.f32.partialorder %v42, inf
    %v46 = vsel %vm45, %v42, %v44
    %vm47 = vcmp.eq.f32.partialorder %v42, 0.0
    %v48 = vand.u32 %v42, 2147483648
    %v49 = vsel %vm47, %v48, %v46
    %v50 = vld [vmem:[#allocation5] sm:$0xff]
    %v51 = vadd.f32 %v50, %v49
    %52 = vst [vmem:[#allocation5] sm:$0xff] %v51
    // Predicated region
    $region14: #{tpu_custom_call.1} parent=1 // pred_check
      _
    $region15: #{tpu_custom_call.1} parent=1 // pred_check_branch
      %54 = sbr.rel (0) target = $region17
    $region16: #{tpu_custom_call.1} parent=1 // pred_region
      %s56 = ssub.s32 128, 128
      %57 = vsyncadd [#allocation4], %s56
      %s59 = sshll.u32 [#allocation5], 4
      %s60 = int_to_ptr.vmem [resolvable:$true] %s59
      %62 = dma.vmem_to_hbm [thread:$0]  %s60, 128, %s1, [#allocation4]
    $region17: #{tpu_custom_call.1} parent=1 // pred_fallthru
      _
    // Predicated region
    $region18: #{tpu_custom_call.1} parent=1 // pred_check
      _
    $region19: #{tpu_custom_call.1} parent=1 // pred_check_branch
      %64 = sbr.rel (0) target = $region21
    $region20: #{tpu_custom_call.1} parent=1 // pred_region
      %65 = dma.done [#allocation4], 128
    $region21: #{tpu_custom_call.1} parent=1 // pred_fallthru
      _
    %66 = vsyncpa [#allocation3], 1
    %67 = vsyncpa [#allocation4], 1

</llo_original>
